<compile_context>
chip_gen: v7x
topology: tpu7x:2x2x1
jax: 0.10.0
libtpu: 0.0.40
codegen_flags: <defaults>
</compile_context>

<pallas_src>
import jax
import jax.numpy as jnp
from jax.experimental import pallas as pl
from jax.experimental.pallas import tpu as pltpu

_DEFAULT_TILE_BYTES = 12 * 1024 * 1024   # ~12 MiB output tile (x2 buffers)
_VMEM_LIMIT_BYTES = 40 * 1024 * 1024     # safe on v5e/v6e (128 MiB) & v7x (64 MiB)


def _trend_kernel(tf_ref, time_ref, coef_ref, intercept_ref, out_ref):
    # tf_ref:        (1,)     f32 in SMEM (runtime trend_factor scalar)
    # time_ref:      (tb, 1)  f32 in VMEM
    # coef_ref:      (1, td)  f32 in VMEM
    # intercept_ref: (1, td)  f32 in VMEM
    # out_ref:       (tb, td) f32 in VMEM
    tf = tf_ref[0]
    # Single fused broadcast-MAD: (1,td) + ((1,td) * (tb,1)) -> (tb,td).
    out_ref[...] = intercept_ref[...] + (tf * coef_ref[...]) * time_ref[...]


def _round_up(x, m):
    return (x + m - 1) // m * m


def _cdiv(a, b):
    return (a + b - 1) // b


def trend_model_forward(time, coef, intercept, trend_factor=1.0,
                        *, tile_bytes=_DEFAULT_TILE_BYTES):
    """Pallas implementation of TrendModel.forward.

    Args:
      time:      (B,) float
      coef:      (D,) float   (fitted slope per series)
      intercept: (D,) float   (fitted intercept per series)
      trend_factor: python/scalar multiplier
      tile_bytes: cap (bytes) for one output tile (exposed for testing)
    Returns:
      (B, D) float32
    """
    B = time.shape[0]
    D = coef.shape[0]

    time_2d = time.astype(jnp.float32).reshape(B, 1)
    coef_2d = coef.astype(jnp.float32).reshape(1, D)
    intercept_2d = intercept.astype(jnp.float32).reshape(1, D)
    tf_arr = jnp.asarray(trend_factor, dtype=jnp.float32).reshape(1)

    smem_spec = pl.BlockSpec(memory_space=pltpu.MemorySpace.SMEM)
    out_shape = jax.ShapeDtypeStruct((B, D), jnp.float32)

    row_bytes = D * 4
    b8 = _round_up(B, 8)

    if 8 * row_bytes <= tile_bytes:
        # ---- Full-row tiles: tile only over B. ----
        tb_budget = max(8, (tile_bytes // row_bytes) // 8 * 8)
        tb = min(b8, tb_budget)

        if tb >= B:
            # Single block: grid-free call, no pipelining machinery.
            return pl.pallas_call(
                _trend_kernel,
                out_shape=out_shape,
                in_specs=[
                    smem_spec,
                    pl.BlockSpec((B, 1), lambda: (0, 0)),
                    pl.BlockSpec((1, D), lambda: (0, 0)),
                    pl.BlockSpec((1, D), lambda: (0, 0)),
                ],
                out_specs=pl.BlockSpec((B, D), lambda: (0, 0)),
                compiler_params=pltpu.CompilerParams(
                    vmem_limit_bytes=_VMEM_LIMIT_BYTES),
            )(tf_arr, time_2d, coef_2d, intercept_2d)

        # Megacore balance (v7x has 2 TCs): prefer an even parallel tile count.
        nb = _cdiv(B, tb)
        if nb > 1 and nb % 2 == 1:
            tb_alt = _round_up(_cdiv(B, nb + 1), 8)
            if tb_alt >= 8 and _cdiv(B, tb_alt) % 2 == 0:
                tb = tb_alt

        grid = (_cdiv(B, tb),)
        return pl.pallas_call(
            _trend_kernel,
            out_shape=out_shape,
            grid=grid,
            in_specs=[
                smem_spec,
                pl.BlockSpec((tb, 1), lambda i: (i, 0)),
                # coef/intercept are grid-resident: full extent, constant map.
                pl.BlockSpec((1, D), lambda i: (0, 0)),
                pl.BlockSpec((1, D), lambda i: (0, 0)),
            ],
            out_specs=pl.BlockSpec((tb, D), lambda i: (i, 0)),
            compiler_params=pltpu.CompilerParams(
                dimension_semantics=("parallel",),
                vmem_limit_bytes=_VMEM_LIMIT_BYTES),
        )(tf_arr, time_2d, coef_2d, intercept_2d)

    # ---- Extreme-D fallback: 2-D tiling (D too wide for a full-row tile). ----
    tb = min(b8, 256)
    td = max(128, (tile_bytes // (tb * 4)) // 128 * 128)
    grid = (_cdiv(B, tb), _cdiv(D, td))
    return pl.pallas_call(
        _trend_kernel,
        out_shape=out_shape,
        grid=grid,
        in_specs=[
            smem_spec,
            pl.BlockSpec((tb, 1), lambda i, j: (i, 0)),
            pl.BlockSpec((1, td), lambda i, j: (0, j)),
            pl.BlockSpec((1, td), lambda i, j: (0, j)),
        ],
        out_specs=pl.BlockSpec((tb, td), lambda i, j: (i, j)),
        compiler_params=pltpu.CompilerParams(
            dimension_semantics=("parallel", "parallel"),
            vmem_limit_bytes=_VMEM_LIMIT_BYTES),
    )(tf_arr, time_2d, coef_2d, intercept_2d)


def _ref(time, coef, intercept, tf):
    return intercept[None, :] + tf * coef[None, :] * time[:, None]


if __name__ == "__main__":
    # TODO(synk): TrendModel.fit (pandas resample + sklearn LinearRegression)
    # has no Pallas equivalent; coef/intercept are taken as given parameters.
    key = jax.random.PRNGKey(0)
    k_time, k_coef, k_int = jax.random.split(key, 3)

    # --- Test 1: tiny single-block path (B=8, D=32). ---
    B, D = 8, 32
    time = jnp.linspace(0.0, 1.0, B, dtype=jnp.float32) \
        + 0.01 * jax.random.normal(k_time, (B,), dtype=jnp.float32)
    coef = jax.random.normal(k_coef, (D,), dtype=jnp.float32)
    intercept = jax.random.normal(k_int, (D,), dtype=jnp.float32)
    trend_factor = 1.5

    out = jax.block_until_ready(
        trend_model_forward(time, coef, intercept, trend_factor))
    assert out.shape == (B, D)
    assert jnp.allclose(out, _ref(time, coef, intercept, trend_factor),
                        atol=1e-5, rtol=1e-5)

    # --- Test 2: 1-D gridded full-row path with partial edge tile
    #     (non-aligned B and D, small forced tile budget). ---
    k_t2, k_c2, k_i2 = jax.random.split(jax.random.PRNGKey(1), 3)
    B2, D2 = 100, 200
    time2 = jax.random.normal(k_t2, (B2,), dtype=jnp.float32)
    coef2 = jax.random.normal(k_c2, (D2,), dtype=jnp.float32)
    intercept2 = jax.random.normal(k_i2, (D2,), dtype=jnp.float32)
    out2 = jax.block_until_ready(
        trend_model_forward(time2, coef2, intercept2, 0.75,
                            tile_bytes=64 * 1024))
    assert out2.shape == (B2, D2)
    assert jnp.allclose(out2, _ref(time2, coef2, intercept2, 0.75),
                        atol=1e-5, rtol=1e-5)

    # --- Test 3: 2-D gridded fallback path (forced tiny tile budget). ---
    k_t3, k_c3, k_i3 = jax.random.split(jax.random.PRNGKey(2), 3)
    B3, D3 = 64, 300
    time3 = jax.random.normal(k_t3, (B3,), dtype=jnp.float32)
    coef3 = jax.random.normal(k_c3, (D3,), dtype=jnp.float32)
    intercept3 = jax.random.normal(k_i3, (D3,), dtype=jnp.float32)
    out3 = jax.block_until_ready(
        trend_model_forward(time3, coef3, intercept3, -0.5,
                            tile_bytes=8 * 1024))
    assert out3.shape == (B3, D3)
    assert jnp.allclose(out3, _ref(time3, coef3, intercept3, -0.5),
                        atol=1e-5, rtol=1e-5)

    print("KERNEL_OK")
</pallas_src>

<mosaic_0001>
module attributes {stable_mosaic.version = 11 : i64} {
  func.func @_trend_kernel(%arg0: memref<1xf32, #tpu.memory_space<smem>>, %arg1: memref<8x1xf32, #tpu.memory_space<vmem>>, %arg2: memref<1x32xf32, #tpu.memory_space<vmem>>, %arg3: memref<1x32xf32, #tpu.memory_space<vmem>>, %arg4: memref<8x32xf32, #tpu.memory_space<vmem>>) attributes {dimension_semantics = [], scalar_prefetch = 0 : i64, scratch_operands = 0 : i64, tpu.core_type = #tpu.core_type<tc>} {
    %c0 = arith.constant 0 : index
    %0 = memref.load %arg0[%c0] : memref<1xf32, #tpu.memory_space<smem>>
    %c0_0 = arith.constant 0 : index
    %c0_1 = arith.constant 0 : index
    %1 = vector.load %arg3[%c0_0, %c0_1] : memref<1x32xf32, #tpu.memory_space<vmem>>, vector<1x32xf32>
    %c0_2 = arith.constant 0 : index
    %c0_3 = arith.constant 0 : index
    %2 = vector.load %arg2[%c0_2, %c0_3] : memref<1x32xf32, #tpu.memory_space<vmem>>, vector<1x32xf32>
    %3 = vector.broadcast %0 : f32 to vector<1x32xf32>
    %4 = arith.mulf %3, %2 : vector<1x32xf32>
    %c0_4 = arith.constant 0 : index
    %c0_5 = arith.constant 0 : index
    %5 = vector.load %arg1[%c0_4, %c0_5] : memref<8x1xf32, #tpu.memory_space<vmem>>, vector<8x1xf32>
    %6 = vector.broadcast %4 : vector<1x32xf32> to vector<8x32xf32>
    %7 = vector.broadcast %5 : vector<8x1xf32> to vector<8x32xf32>
    %8 = arith.mulf %6, %7 : vector<8x32xf32>
    %9 = vector.broadcast %1 : vector<1x32xf32> to vector<8x32xf32>
    %10 = arith.addf %9, %8 : vector<8x32xf32>
    %c0_6 = arith.constant 0 : index
    %c0_7 = arith.constant 0 : index
    %11 = vector.load %arg4[%c0_6, %c0_7] : memref<8x32xf32, #tpu.memory_space<vmem>>, vector<8x32xf32>
    tpu.vector_store %arg4[%c0_6, %c0_7], %10 {strides = array<i32>} : memref<8x32xf32, #tpu.memory_space<vmem>>, vector<8x32xf32>,
    return
  }
}

</mosaic_0001>

<llo_original>
// kernel: tpu_custom_call.1
$region0: #{tpu_custom_call.1}
  #allocation0 [shape = 'u32[]', space=smem, size = 0x4, offset = 0x4, fixed_abs, tag = 'smem constant byte address 0x4 - core index']
  #allocation1 [shape = 'u32[144,128]{1,0:T(1,128)}', space=vmem, size = 0x12000, scoped, tag = 'internal scratch']
  #allocation2 [shape = 'f32[1]{0:T(128)S(6)}', space=smem, size = 0x200, scoped, tag = 'scoped memory for tpu_custom_call.1']
  %s0 = inlined_call_operand.<no memory space> [shape: f32[1], index: 0, kind: input, shape index: {}]
  %s1 = inlined_call_operand.vmem [shape: f32[8,1], index: 1, kind: input, shape index: {}]
  %s2 = inlined_call_operand.vmem [shape: f32[1,32], index: 2, kind: input, shape index: {}]
  %s3 = inlined_call_operand.vmem [shape: f32[1,32], index: 3, kind: input, shape index: {}]
  %s4 = inlined_call_operand.hbm [shape: f32[8,32], index: 4, kind: output, shape index: {}]
  %s5 = sld [smem:[#allocation0]]
  $region26: #{tpu_custom_call.1} parent=0
    _
  %s7 = ssub.s32 1, %s5
  %s8 = scalar_select 0, %s7, %s5
  %9 = sst [smem:[#allocation2]] %s0
  $region1: #{tpu_custom_call.1} parent=0
    #allocation3 [shape = 'u8[4096]{0}', space=vmem, size = 0x1000, scoped, tag = 'output window, operand 0, single buffered']
    #allocation4 [shape = 's32[1]{0}', space=sflag, size = 0x4, scoped, tag = 'scoped memory for tpu_custom_call.1']
    %10 = vsyncpa [#allocation4], 0
    // Predicated region
    $region2: #{tpu_custom_call.1} parent=1 // pred_check
      _
    $region3: #{tpu_custom_call.1} parent=1 // pred_check_branch
      %12 = sbr.rel (0) target = $region5
    $region4: #{tpu_custom_call.1} parent=1 // pred_region
      _
    $region5: #{tpu_custom_call.1} parent=1 // pred_fallthru
      _
    // Predicated region
    $region6: #{tpu_custom_call.1} parent=1 // pred_check
      _
    $region7: #{tpu_custom_call.1} parent=1 // pred_check_branch
      %14 = sbr.rel (0) target = $region9
    $region8: #{tpu_custom_call.1} parent=1 // pred_region
      _
    $region9: #{tpu_custom_call.1} parent=1 // pred_fallthru
      _
    // Predicated region
    $region10: #{tpu_custom_call.1} parent=1 // pred_check
      _
    $region11: #{tpu_custom_call.1} parent=1 // pred_check_branch
      %16 = sbr.rel (0) target = $region13
    $region12: #{tpu_custom_call.1} parent=1 // pred_region
      _
    $region13: #{tpu_custom_call.1} parent=1 // pred_fallthru
      _
    // Predicated region
    $region14: #{tpu_custom_call.1} parent=1 // pred_check
      _
    $region15: #{tpu_custom_call.1} parent=1 // pred_check_branch
      %18 = sbr.rel (0) target = $region17
    $region16: #{tpu_custom_call.1} parent=1 // pred_region
      _
    $region17: #{tpu_custom_call.1} parent=1 // pred_fallthru
      _
    %s19 = sld [smem:[#allocation2]]
    %v20 = vld [vmem:[%s3] sm:$0x1]
    %v21 = vld [vmem:[%s2] sm:$0x1]
    %v22 = vstv %s19
    %v23 = vmul.f32 %v22, %v21
    %v24 = vld [vmem:[%s1] sm:$0xff]
    %v26 = vlaneseq
    %v27 = vshrl.u32 %v26, 7
    %v28 = vsub.s32 0, %v27
    %v29 = vrot.slane %v23, %v28
    %32 = vset.pattern.permute.xlu0 0
    %33 = vperm.xlu0 %32, %v24
    %v34 = vpop.permute.xlu0 %33
    %v36 = vmul.f32 %v29, %v34
    %v38 = vlaneseq
    %v39 = vshrl.u32 %v38, 7
    %v40 = vsub.s32 0, %v39
    %v41 = vrot.slane %v20, %v40
    %v43 = vadd.f32 %v41, %v36
    %vm44 = vcmask 261120
    %45 = vst.msk [vmem:[#allocation3] sm:$0xff] %vm44, %v43
    // Predicated region
    $region18: #{tpu_custom_call.1} parent=1 // pred_check
      _
    $region19: #{tpu_custom_call.1} parent=1 // pred_check_branch
      %47 = sbr.rel (0) target = $region21
    $region20: #{tpu_custom_call.1} parent=1 // pred_region
      %s49 = ssub.s32 128, 128
      %50 = vsyncadd [#allocation4], %s49
      %s52 = sshll.u32 [#allocation3], 4
      %s53 = int_to_ptr.vmem [resolvable:$true] %s52
      %55 = dma.vmem_to_hbm [thread:$0]  %s53, 128, %s4, [#allocation4]
    $region21: #{tpu_custom_call.1} parent=1 // pred_fallthru
      _
    // Predicated region
    $region22: #{tpu_custom_call.1} parent=1 // pred_check
      _
    $region23: #{tpu_custom_call.1} parent=1 // pred_check_branch
      %57 = sbr.rel (0) target = $region25
    $region24: #{tpu_custom_call.1} parent=1 // pred_region
      %58 = dma.done [#allocation4], 128
    $region25: #{tpu_custom_call.1} parent=1 // pred_fallthru
      _
    %59 = vsyncpa [#allocation4], 1

</llo_original>
